<compile_context>
chip_gen: v7x
topology: tpu7x:2x2x1
jax: 0.10.0
libtpu: 0.0.40
codegen_flags: <defaults>
</compile_context>

<pallas_src>
import functools

import jax
import jax.numpy as jnp
from jax.experimental import pallas as pl
from jax.experimental.pallas import tpu as pltpu


def _triplet_loss_kernel(a_ref, p_ref, n_ref, o_ref, *, margin, dim, mask_lanes):
    # Upcast in-kernel; HBM side may be bf16 or f32.
    a = a_ref[...].astype(jnp.float32)
    p = p_ref[...].astype(jnp.float32)
    n = n_ref[...].astype(jnp.float32)

    pos_diff = a - p
    neg_diff = a - n

    if mask_lanes:
        # D is not a multiple of 128: the physical pad lanes of the last vreg
        # may hold garbage; zero them before the axis=1 reduction.
        col = jax.lax.broadcasted_iota(jnp.int32, pos_diff.shape, 1)
        lane_ok = col < dim
        pos_diff = jnp.where(lane_ok, pos_diff, 0.0)
        neg_diff = jnp.where(lane_ok, neg_diff, 0.0)

    pos_dist = jnp.sqrt(jnp.sum(pos_diff * pos_diff, axis=1, keepdims=True))  # (TB, 1)
    neg_dist = jnp.sqrt(jnp.sum(neg_diff * neg_diff, axis=1, keepdims=True))  # (TB, 1)

    # Per-row hinge loss; each grid step owns its own output block, so the
    # batch axis is embarrassingly parallel (no shared accumulator).
    o_ref[...] = jnp.maximum(pos_dist - neg_dist + jnp.float32(margin), 0.0)


def triplet_loss(anchor, positive, negative, margin=0.5, block_rows=None):
    """Pallas TPU triplet loss. anchor/positive/negative: (B, D) arrays."""
    assert anchor.shape == positive.shape == negative.shape
    assert anchor.ndim == 2
    B, D = anchor.shape

    itemsize = jnp.dtype(anchor.dtype).itemsize
    sub = max(8, 32 // itemsize)  # sublane-packing multiple: f32=8, bf16=16, int8=32

    def round_up(x, m):
        return ((x + m - 1) // m) * m

    # Physical lane footprint per row (lanes padded to 128 inside VMEM).
    d_pad = max(128, round_up(D, 128))
    bytes_per_row = d_pad * itemsize

    # ~4 MiB per input per grid step (>= ~86% of HBM roofline); 3 inputs x 2
    # pipeline buffers <= ~24 MiB, well inside the 48 MiB VMEM limit below.
    target_bytes_per_input_per_step = 4 * 1024 * 1024
    tb_cap = max(sub, (target_bytes_per_input_per_step // bytes_per_row) // sub * sub)
    tb_cap = min(tb_cap, 8192)
    if block_rows is not None:
        tb_cap = max(sub, round_up(int(block_rows), sub))

    if B >= sub:
        # No padding / no extra HBM traffic. TB <= B, so the last (possibly
        # ragged) block stays within the array; Pallas masks the OOB tail.
        TB = min(tb_cap, (B // sub) * sub)
        B_pad = B
        a, p, n = anchor, positive, negative
    else:
        # Tiny batch (< one sublane group): pad rows up to `sub`; negligible.
        TB = sub
        B_pad = sub
        pad = ((0, B_pad - B), (0, 0))
        a = jnp.pad(anchor, pad)
        p = jnp.pad(positive, pad)
        n = jnp.pad(negative, pad)

    num_blocks = -(-B_pad // TB)

    kernel = functools.partial(
        _triplet_loss_kernel,
        margin=float(margin),
        dim=D,
        mask_lanes=(D % 128 != 0),
    )

    in_spec = pl.BlockSpec((TB, D), lambda i: (i, 0))

    losses = pl.pallas_call(
        kernel,
        out_shape=jax.ShapeDtypeStruct((B_pad, 1), jnp.float32),
        grid=(num_blocks,),
        in_specs=[in_spec, in_spec, in_spec],
        out_specs=pl.BlockSpec((TB, 1), lambda i: (i, 0)),
        compiler_params=pltpu.CompilerParams(
            dimension_semantics=("parallel",),   # independent per-block outputs
            vmem_limit_bytes=48 * 1024 * 1024,   # safe on v7x (64 MiB physical)
        ),
    )(a, p, n)

    # Tiny finalize in the wrapper: mean over the TRUE batch rows.
    return jnp.mean(losses[:B])


def _ref_triplet_loss(anchor, positive, negative, margin=0.5):
    pos_d = jnp.linalg.norm(
        anchor.astype(jnp.float32) - positive.astype(jnp.float32), axis=1)
    neg_d = jnp.linalg.norm(
        anchor.astype(jnp.float32) - negative.astype(jnp.float32), axis=1)
    return jnp.mean(jnp.maximum(pos_d - neg_d + margin, 0.0))


if __name__ == "__main__":
    ok = True

    # Case 1: shapes from the original demo (B=8, D=32), f32.
    k_a, k_p, k_n = jax.random.split(jax.random.PRNGKey(0), 3)
    B, D = 8, 32
    anchor = jax.random.normal(k_a, (B, D), dtype=jnp.float32)
    positive = jax.random.normal(k_p, (B, D), dtype=jnp.float32)
    negative = jax.random.normal(k_n, (B, D), dtype=jnp.float32)
    loss = triplet_loss(anchor, positive, negative, margin=0.5)
    jax.block_until_ready(loss)
    ref = _ref_triplet_loss(anchor, positive, negative, 0.5)
    ok &= bool(jnp.allclose(loss, ref, atol=1e-5))

    # Case 2: unaligned shapes -> ragged last batch block + lane mask, multiple
    # grid steps (block_rows=16 forces 2 tiles for B=22).
    k_a2, k_p2, k_n2 = jax.random.split(jax.random.PRNGKey(1), 3)
    B2, D2 = 22, 200
    a2 = jax.random.normal(k_a2, (B2, D2), dtype=jnp.float32)
    p2 = jax.random.normal(k_p2, (B2, D2), dtype=jnp.float32)
    n2 = jax.random.normal(k_n2, (B2, D2), dtype=jnp.float32)
    loss2 = triplet_loss(a2, p2, n2, margin=0.5, block_rows=16)
    jax.block_until_ready(loss2)
    ref2 = _ref_triplet_loss(a2, p2, n2, 0.5)
    ok &= bool(jnp.allclose(loss2, ref2, atol=1e-5))

    # Case 3: bf16 embeddings in HBM (sublane multiple = 16), f32 math in-kernel.
    a3 = a2.astype(jnp.bfloat16)
    p3 = p2.astype(jnp.bfloat16)
    n3 = n2.astype(jnp.bfloat16)
    loss3 = triplet_loss(a3, p3, n3, margin=0.5)
    jax.block_until_ready(loss3)
    ref3 = _ref_triplet_loss(a3, p3, n3, 0.5)
    ok &= bool(jnp.allclose(loss3, ref3, atol=1e-3, rtol=1e-3))

    # Case 4: tiny batch (B < sublane group) exercises the small-B pad branch.
    k_a4, k_p4, k_n4 = jax.random.split(jax.random.PRNGKey(2), 3)
    B4, D4 = 6, 40
    a4 = jax.random.normal(k_a4, (B4, D4), dtype=jnp.float32)
    p4 = jax.random.normal(k_p4, (B4, D4), dtype=jnp.float32)
    n4 = jax.random.normal(k_n4, (B4, D4), dtype=jnp.float32)
    loss4 = triplet_loss(a4, p4, n4, margin=0.5)
    jax.block_until_ready(loss4)
    ref4 = _ref_triplet_loss(a4, p4, n4, 0.5)
    ok &= bool(jnp.allclose(loss4, ref4, atol=1e-5))

    assert ok, (loss, ref, loss2, ref2, loss3, ref3, loss4, ref4)
    print("KERNEL_OK")
</pallas_src>

<mosaic_0001>
module attributes {stable_mosaic.version = 11 : i64} {
  func.func @_triplet_loss_kernel(%arg0: i32, %arg1: memref<8x32xf32, #tpu.memory_space<vmem>>, %arg2: memref<8x32xf32, #tpu.memory_space<vmem>>, %arg3: memref<8x32xf32, #tpu.memory_space<vmem>>, %arg4: memref<8x1xf32, #tpu.memory_space<vmem>>) attributes {dimension_semantics = [#tpu.dimension_semantics<parallel>], iteration_bounds = array<i64: 1>, scalar_prefetch = 0 : i64, scratch_operands = 0 : i64, tpu.core_type = #tpu.core_type<tc>, window_params = [{transform_indices = @transform_0, window_bounds = array<i64: 8, 32>}, {transform_indices = @transform_1, window_bounds = array<i64: 8, 32>}, {transform_indices = @transform_2, window_bounds = array<i64: 8, 32>}, {transform_indices = @transform_3, window_bounds = array<i64: 8, 1>}]} {
    %c0 = arith.constant 0 : index
    %c0_0 = arith.constant 0 : index
    %0 = vector.load %arg1[%c0, %c0_0] : memref<8x32xf32, #tpu.memory_space<vmem>>, vector<8x32xf32>
    %c0_1 = arith.constant 0 : index
    %c0_2 = arith.constant 0 : index
    %1 = vector.load %arg2[%c0_1, %c0_2] : memref<8x32xf32, #tpu.memory_space<vmem>>, vector<8x32xf32>
    %c0_3 = arith.constant 0 : index
    %c0_4 = arith.constant 0 : index
    %2 = vector.load %arg3[%c0_3, %c0_4] : memref<8x32xf32, #tpu.memory_space<vmem>>, vector<8x32xf32>
    %3 = arith.subf %0, %1 : vector<8x32xf32>
    %4 = arith.subf %0, %2 : vector<8x32xf32>
    %5 = tpu.iota {dimensions = array<i32: 1>} : vector<8x32xi32>
    %c32_i32 = arith.constant 32 : i32
    %6 = vector.broadcast %c32_i32 : i32 to vector<8x32xi32>
    %7 = arith.cmpi slt, %5, %6 : vector<8x32xi32>
    %cst = arith.constant 0.000000e+00 : f32
    %8 = vector.broadcast %cst : f32 to vector<8x32xf32>
    %9 = arith.select %7, %3, %8 : vector<8x32xi1>, vector<8x32xf32>
    %cst_5 = arith.constant 0.000000e+00 : f32
    %10 = vector.broadcast %cst_5 : f32 to vector<8x32xf32>
    %11 = arith.select %7, %4, %10 : vector<8x32xi1>, vector<8x32xf32>
    %12 = arith.mulf %9, %9 : vector<8x32xf32>
    %cst_6 = arith.constant dense<0.000000e+00> : vector<8xf32>
    %13 = vector.multi_reduction <add>, %12, %cst_6 [1] : vector<8x32xf32> to vector<8xf32>
    %14 = vector.shape_cast %13 : vector<8xf32> to vector<8x1xf32>
    %15 = math.sqrt %14 : vector<8x1xf32>
    %16 = arith.mulf %11, %11 : vector<8x32xf32>
    %cst_7 = arith.constant dense<0.000000e+00> : vector<8xf32>
    %17 = vector.multi_reduction <add>, %16, %cst_7 [1] : vector<8x32xf32> to vector<8xf32>
    %18 = vector.shape_cast %17 : vector<8xf32> to vector<8x1xf32>
    %19 = math.sqrt %18 : vector<8x1xf32>
    %20 = arith.subf %15, %19 : vector<8x1xf32>
    %cst_8 = arith.constant 5.000000e-01 : f32
    %21 = vector.broadcast %cst_8 : f32 to vector<8x1xf32>
    %22 = arith.addf %20, %21 : vector<8x1xf32>
    %cst_9 = arith.constant 0.000000e+00 : f32
    %23 = vector.broadcast %cst_9 : f32 to vector<8x1xf32>
    %24 = arith.maximumf %22, %23 : vector<8x1xf32>
    %c0_10 = arith.constant 0 : index
    %c0_11 = arith.constant 0 : index
    %25 = vector.load %arg4[%c0_10, %c0_11] : memref<8x1xf32, #tpu.memory_space<vmem>>, vector<8x1xf32>
    tpu.vector_store %arg4[%c0_10, %c0_11], %24 {strides = array<i32>} : memref<8x1xf32, #tpu.memory_space<vmem>>, vector<8x1xf32>,
    return
  }
  func.func @transform_0(%arg0: i32) -> (i32, i32) {
    %c0_i32 = arith.constant 0 : i32
    %c0_i32_0 = arith.constant 0 : i32
    return %arg0, %c0_i32 : i32, i32
  }
  func.func @transform_1(%arg0: i32) -> (i32, i32) {
    %c0_i32 = arith.constant 0 : i32
    %c0_i32_0 = arith.constant 0 : i32
    return %arg0, %c0_i32 : i32, i32
  }
  func.func @transform_2(%arg0: i32) -> (i32, i32) {
    %c0_i32 = arith.constant 0 : i32
    %c0_i32_0 = arith.constant 0 : i32
    return %arg0, %c0_i32 : i32, i32
  }
  func.func @transform_3(%arg0: i32) -> (i32, i32) {
    %c0_i32 = arith.constant 0 : i32
    %c0_i32_0 = arith.constant 0 : i32
    return %arg0, %c0_i32 : i32, i32
  }
}

</mosaic_0001>

<llo_original>
// kernel: tpu_custom_call.1
$region0: #{tpu_custom_call.1}
  #allocation0 [shape = 'u32[]', space=smem, size = 0x4, offset = 0x4, fixed_abs, tag = 'smem constant byte address 0x4 - core index']
  #allocation1 [shape = 'u32[144,128]{1,0:T(1,128)}', space=vmem, size = 0x12000, scoped, tag = 'internal scratch']
  %s0 = inlined_call_operand.hbm [shape: f32[8,32], index: 0, kind: input, shape index: {}]
  %s1 = inlined_call_operand.hbm [shape: f32[8,32], index: 1, kind: input, shape index: {}]
  %s2 = inlined_call_operand.hbm [shape: f32[8,32], index: 2, kind: input, shape index: {}]
  %s3 = inlined_call_operand.vmem [shape: f32[8,1], index: 3, kind: output, shape index: {}]
  %s4 = sld [smem:[#allocation0]]
  $region34: #{tpu_custom_call.1} parent=0
    _
  %s6 = ssub.s32 1, %s4
  %s7 = scalar_select 0, %s6, %s4
  $region1: #{tpu_custom_call.1} parent=0
    #allocation2 [shape = 'u8[4096]{0}', space=vmem, size = 0x1000, scoped, tag = 'input window, operand 0, single buffered']
    #allocation3 [shape = 's32[1]{0}', space=sflag, size = 0x4, scoped, tag = 'scoped memory for tpu_custom_call.1']
    #allocation4 [shape = 'u8[4096]{0}', space=vmem, size = 0x1000, scoped, tag = 'input window, operand 1, single buffered']
    #allocation5 [shape = 's32[1]{0}', space=sflag, size = 0x4, scoped, tag = 'scoped memory for tpu_custom_call.1']
    #allocation6 [shape = 'u8[4096]{0}', space=vmem, size = 0x1000, scoped, tag = 'input window, operand 2, single buffered']
    %8 = vsyncpa [#allocation3], 0
    %9 = vsyncpa [#allocation5], 0
    // Predicated region
    $region2: #{tpu_custom_call.1} parent=1 // pred_check
      _
    $region3: #{tpu_custom_call.1} parent=1 // pred_check_branch
      %11 = sbr.rel (0) target = $region5
    $region4: #{tpu_custom_call.1} parent=1 // pred_region
      %s13 = ssub.s32 128, 128
      %14 = vsyncadd [#allocation3], %s13
      %s16 = sshll.u32 [#allocation2], 4
      %s17 = int_to_ptr.vmem [resolvable:$true] %s16
      %19 = dma.hbm_to_vmem [thread:$0]  %s0, 128, %s17, [#allocation3]
    $region5: #{tpu_custom_call.1} parent=1 // pred_fallthru
      _
    // Predicated region
    $region6: #{tpu_custom_call.1} parent=1 // pred_check
      _
    $region7: #{tpu_custom_call.1} parent=1 // pred_check_branch
      %21 = sbr.rel (0) target = $region9
    $region8: #{tpu_custom_call.1} parent=1 // pred_region
      %s23 = ssub.s32 128, 128
      %24 = vsyncadd [#allocation5], %s23
      %s26 = sshll.u32 [#allocation4], 4
      %s27 = int_to_ptr.vmem [resolvable:$true] %s26
      %29 = dma.hbm_to_vmem [thread:$0]  %s1, 128, %s27, [#allocation5]
    $region9: #{tpu_custom_call.1} parent=1 // pred_fallthru
      _
    // Predicated region
    $region10: #{tpu_custom_call.1} parent=1 // pred_check
      _
    $region11: #{tpu_custom_call.1} parent=1 // pred_check_branch
      %31 = sbr.rel (0) target = $region13
    $region12: #{tpu_custom_call.1} parent=1 // pred_region
      %s33 = ssub.s32 128, 128
      %34 = vsyncadd [#allocation5], %s33
      %s36 = sshll.u32 [#allocation6], 4
      %s37 = int_to_ptr.vmem [resolvable:$true] %s36
      %39 = dma.hbm_to_vmem [thread:$0]  %s2, 128, %s37, [#allocation5]
    $region13: #{tpu_custom_call.1} parent=1 // pred_fallthru
      _
    // Predicated region
    $region14: #{tpu_custom_call.1} parent=1 // pred_check
      _
    $region15: #{tpu_custom_call.1} parent=1 // pred_check_branch
      %41 = sbr.rel (0) target = $region17
    $region16: #{tpu_custom_call.1} parent=1 // pred_region
      %42 = dma.done [#allocation3], 128
    $region17: #{tpu_custom_call.1} parent=1 // pred_fallthru
      _
    // Predicated region
    $region18: #{tpu_custom_call.1} parent=1 // pred_check
      _
    $region19: #{tpu_custom_call.1} parent=1 // pred_check_branch
      %44 = sbr.rel (0) target = $region21
    $region20: #{tpu_custom_call.1} parent=1 // pred_region
      %45 = dma.done [#allocation5], 128
    $region21: #{tpu_custom_call.1} parent=1 // pred_fallthru
      _
    // Predicated region
    $region22: #{tpu_custom_call.1} parent=1 // pred_check
      _
    $region23: #{tpu_custom_call.1} parent=1 // pred_check_branch
      %47 = sbr.rel (0) target = $region25
    $region24: #{tpu_custom_call.1} parent=1 // pred_region
      %48 = dma.done [#allocation5], 128
    $region25: #{tpu_custom_call.1} parent=1 // pred_fallthru
      _
    %v49 = vld [vmem:[#allocation2] sm:$0xff]
    %v50 = vld [vmem:[#allocation4] sm:$0xff]
    %v51 = vld [vmem:[#allocation6] sm:$0xff]
    %v52 = vsub.f32 %v49, %v50
    %v53 = vsub.f32 %v49, %v51
    %v54 = vlaneseq
    %v55 = vand.u32 %v54, 127
    %vm56 = vcmp.lt.s32.totalorder %v55, 32
    %v57 = vsel %vm56, %v52, 0.0
    %v58 = vsel %vm56, %v53, 0.0
    %v59 = vmul.f32 %v57, %v57
    %vm60 = vcmask 261120
    %v61 = vsel %vm60, %v59, 0.0
    %62 = vadd.xlane.f32.xlu0 %v61
    %v63 = vpop.xlane.xlu0 %62
    %v64 = vrsqrt.pop %v63
    %v65 = vmul.f32 %v63, %v64
    %vm66 = vcmp.eq.f32.partialorder %v63, inf
    %v67 = vsel %vm66, %v63, %v65
    %vm68 = vcmp.eq.f32.partialorder %v63, 0.0
    %v69 = vand.u32 %v63, 2147483648
    %v70 = vsel %vm68, %v69, %v67
    %v71 = vmul.f32 %v58, %v58
    %v72 = vsel %vm60, %v71, 0.0
    %73 = vadd.xlane.f32.xlu0 %v72
    %v74 = vpop.xlane.xlu0 %73
    %v75 = vrsqrt.pop %v74
    %v76 = vmul.f32 %v74, %v75
    %vm77 = vcmp.eq.f32.partialorder %v74, inf
    %v78 = vsel %vm77, %v74, %v76
    %vm79 = vcmp.eq.f32.partialorder %v74, 0.0
    %v80 = vand.u32 %v74, 2147483648
    %v81 = vsel %vm79, %v80, %v78
    %v82 = vsub.f32 %v70, %v81
    %v83 = vadd.f32 %v82, 0.5
    %v84 = vmax.f32 %v83, 0.0
    %vm85 = vcmask 7168
    %86 = vst.msk [vmem:[%s3] sm:$0xff] %vm85, %v84
    // Predicated region
    $region26: #{tpu_custom_call.1} parent=1 // pred_check
      _
    $region27: #{tpu_custom_call.1} parent=1 // pred_check_branch
      %88 = sbr.rel (0) target = $region29
    $region28: #{tpu_custom_call.1} parent=1 // pred_region
      _
    $region29: #{tpu_custom_call.1} parent=1 // pred_fallthru
      _
    // Predicated region
    $region30: #{tpu_custom_call.1} parent=1 // pred_check
      _
    $region31: #{tpu_custom_call.1} parent=1 // pred_check_branch
      %90 = sbr.rel (0) target = $region33
    $region32: #{tpu_custom_call.1} parent=1 // pred_region
      _
    $region33: #{tpu_custom_call.1} parent=1 // pred_fallthru
      _
    %91 = vsyncpa [#allocation3], 1
    %92 = vsyncpa [#allocation5], 1

</llo_original>
